<compile_context>
chip_gen: v7x
topology: tpu7x:2x2x1
jax: 0.10.0
libtpu: 0.0.40
codegen_flags: <defaults>
</compile_context>

<pallas_src>
import functools
import math

import jax
import jax.numpy as jnp
from jax import lax
from jax.experimental import pallas as pl
from jax.experimental.pallas import tpu as pltpu

_VMEM_LIMIT = 32 * 1024 * 1024


def _full_spec(shape):
    """Whole-array VMEM block (grid = ()), valid because block == full array dims."""
    return pl.BlockSpec(shape, lambda *_: (0,) * len(shape))


# ----------------------------------------------------------------------------
# Pallas kernels
# ----------------------------------------------------------------------------

def _linear_kernel(x_ref, w_ref, b_ref, o_ref):
    o_ref[...] = (jnp.dot(x_ref[...], w_ref[...], preferred_element_type=jnp.float32)
                  + b_ref[...])


def linear(x, w, b):
    """x: [M, K], w: [K, Dout] (pre-transposed), b: [1, Dout]."""
    M, K = x.shape
    Dout = w.shape[1]
    return pl.pallas_call(
        _linear_kernel,
        out_shape=jax.ShapeDtypeStruct((M, Dout), jnp.float32),
        in_specs=[_full_spec((M, K)), _full_spec((K, Dout)), _full_spec((1, Dout))],
        out_specs=_full_spec((M, Dout)),
        compiler_params=pltpu.CompilerParams(vmem_limit_bytes=_VMEM_LIMIT),
    )(x, w, b)


def _fused_layer_kernel(h0_ref, pe_ref, adj_ref,
                        wqkv_ref, bqkv_ref, gamma_ref, beta_ref,
                        g1_wy_ref, g1_bwy_ref, g1_ux_ref, g1_bux_ref, g1_ug_ref, g1_bug_ref,
                        bn_scale_ref, bn_shift_ref, w1_ref, b1_ref, w2_ref, b2_ref,
                        g2_wy_ref, g2_bwy_ref, g2_ux_ref, g2_bux_ref, g2_ug_ref, g2_bug_ref,
                        o_ref, *, num_heads, head_dim, bg, leaky_slope):
    """One full dagformer layer, resident in VMEM:
       h0 += dagpe; h1 = gamma*TransformerConv(h0)+beta; h1 = gate(h0,h1);
       h2 = LeakyReLU(MLP(BN(h1))); h0_out = gate(h1, h2)."""
    D = num_heads * head_dim
    h0 = h0_ref[...] + pe_ref[...]                                  # 'h0, dagpe -> h0'

    # --- TransformerConv(root_weight=False) as dense masked MHA + gamma/beta ---
    qkv = (jnp.dot(h0, wqkv_ref[...], preferred_element_type=jnp.float32)
           + bqkv_ref[...])                                         # [N, 3D]  (q | k | v)
    mask = adj_ref[...] > 0                                         # adj[i,j]=1 <=> edge j -> i
    scale = 1.0 / math.sqrt(head_dim)
    outs = []
    # TODO(synk): for larger D / N, switch to head-major [H,N,hd] batched einsum and
    # flash-style (query-block x kv-block) tiling of adj/scores instead of the
    # per-head unrolled loop over full [N,N] score matrices.
    for h in range(num_heads):
        qh = qkv[:, h * head_dim:(h + 1) * head_dim]
        kh = qkv[:, D + h * head_dim:D + (h + 1) * head_dim]
        vh = qkv[:, 2 * D + h * head_dim:2 * D + (h + 1) * head_dim]
        s = jnp.dot(qh, kh.T, preferred_element_type=jnp.float32) * scale
        s = jnp.where(mask, s, -1e30)
        m = jnp.max(s, axis=1, keepdims=True)
        p = jnp.where(mask, jnp.exp(s - m), 0.0)
        denom = jnp.sum(p, axis=1, keepdims=True)
        alpha = p / jnp.where(denom > 0.0, denom, 1.0)              # isolated nodes -> 0 (PyG)
        outs.append(jnp.dot(alpha, vh, preferred_element_type=jnp.float32))
    h1 = jnp.concatenate(outs, axis=1)                              # [N, D]
    h1 = gamma_ref[...] * h1 + beta_ref[...]

    # (Dead branch in the reference graph: Conv1d(k=3, pad=1) + ReLU over a length-1
    #  sequence whose output is never consumed -- intentionally not computed.)

    def gate(x, y, wy_ref, bwy_ref, ux_ref, bux_ref, ug_ref, bug_ref):
        # concatenated projections: y @ [Wr|Wz|Wg], x @ [Ur|Uz]
        yproj = jnp.dot(y, wy_ref[...], preferred_element_type=jnp.float32) + bwy_ref[...]
        xproj = jnp.dot(x, ux_ref[...], preferred_element_type=jnp.float32) + bux_ref[...]
        r = jax.nn.sigmoid(yproj[:, :D] + xproj[:, :D])
        z = jax.nn.sigmoid(yproj[:, D:2 * D] + xproj[:, D:] - bg)
        hc = jnp.tanh(yproj[:, 2 * D:]
                      + jnp.dot(r * x, ug_ref[...], preferred_element_type=jnp.float32)
                      + bug_ref[...])
        return (1.0 - z) * x + z * hc

    # GatingMechanism(h0, h1) -> h1
    h1 = gate(h0, h1, g1_wy_ref, g1_bwy_ref, g1_ux_ref, g1_bux_ref, g1_ug_ref, g1_bug_ref)

    # BatchNorm1d(eval, folded) -> MLP([D, 2D, D], ReLU) -> Dropout(eval: id) -> LeakyReLU
    hn = h1 * bn_scale_ref[...] + bn_shift_ref[...]
    z1 = jnp.maximum(
        jnp.dot(hn, w1_ref[...], preferred_element_type=jnp.float32) + b1_ref[...], 0.0)
    h2 = jnp.dot(z1, w2_ref[...], preferred_element_type=jnp.float32) + b2_ref[...]
    h2 = jnp.where(h2 > 0, h2, leaky_slope * h2)

    # GatingMechanism(h1, h2_leaky) -> h0
    o_ref[...] = gate(h1, h2, g2_wy_ref, g2_bwy_ref, g2_ux_ref, g2_bux_ref,
                      g2_ug_ref, g2_bug_ref)


def fused_layer(h0, dagpe, adj, lp, num_heads, head_dim,
                bg=0.1, eps=1e-5, leaky_slope=0.01):
    N, D = h0.shape
    attn, g1, g2, bn = lp["attn"], lp["gate1"], lp["gate2"], lp["bn_mlp"]
    Dh = bn["w1"].shape[1]

    # fold BatchNorm1d (eval mode, running stats) into a scale/shift
    bn_scale = bn["bn_g"] * lax.rsqrt(bn["bn_v"] + eps)
    bn_shift = bn["bn_b"] - bn["bn_m"] * bn_scale

    in_arrays = [h0, dagpe, adj,
                 attn["wqkv"], attn["bqkv"], attn["gamma"], attn["beta"],
                 g1["wy"], g1["bwy"], g1["ux"], g1["bux"], g1["ug"], g1["bug"],
                 bn_scale, bn_shift, bn["w1"], bn["b1"], bn["w2"], bn["b2"],
                 g2["wy"], g2["bwy"], g2["ux"], g2["bux"], g2["ug"], g2["bug"]]

    flops = (2 * N * D * 3 * D                              # fused QKV projection
             + num_heads * (2 * N * N * head_dim) * 2       # scores + context
             + 2 * (2 * N * D * 3 * D + 2 * N * D * 2 * D + 2 * N * D * D)  # two gates
             + 2 * N * D * Dh + 2 * N * Dh * D)             # MLP
    transcendentals = num_heads * N * N + 2 * (3 * N * D)   # exp + sigmoid/tanh
    bytes_accessed = (sum(int(a.size) * a.dtype.itemsize for a in in_arrays)
                      + N * D * 4)

    return pl.pallas_call(
        functools.partial(_fused_layer_kernel, num_heads=num_heads, head_dim=head_dim,
                          bg=bg, leaky_slope=leaky_slope),
        out_shape=jax.ShapeDtypeStruct((N, D), jnp.float32),
        in_specs=[_full_spec(a.shape) for a in in_arrays],
        out_specs=_full_spec((N, D)),
        compiler_params=pltpu.CompilerParams(vmem_limit_bytes=_VMEM_LIMIT),
        cost_estimate=pl.CostEstimate(flops=flops, transcendentals=transcendentals,
                                      bytes_accessed=bytes_accessed),
    )(*in_arrays)


def _pool_linear_kernel(sel_ref, h_ref, w_ref, b_ref, o_ref):
    """o[g] = (max over rows n with sel[g,n] > 0 of h[n]) @ w + b, empty segments -> 0."""
    sel = sel_ref[...]                                   # [G, N] float {0, 1}
    h = h_ref[...]                                       # [N, D]
    masked = jnp.where(sel[:, :, None] > 0.0, h[None, :, :], -3.0e38)
    pooled = jnp.max(masked, axis=1)                     # [G, D]
    has = jnp.sum(sel, axis=1, keepdims=True) > 0.0
    pooled = jnp.where(has, pooled, 0.0)                 # guard against empty segments
    o_ref[...] = (jnp.dot(pooled, w_ref[...], preferred_element_type=jnp.float32)
                  + b_ref[...])


def pool_linear(sel, h, w, b):
    G, N = sel.shape
    D = h.shape[1]
    Dout = w.shape[1]
    return pl.pallas_call(
        _pool_linear_kernel,
        out_shape=jax.ShapeDtypeStruct((G, Dout), jnp.float32),
        in_specs=[_full_spec((G, N)), _full_spec((N, D)),
                  _full_spec((D, Dout)), _full_spec((1, Dout))],
        out_specs=_full_spec((G, Dout)),
        compiler_params=pltpu.CompilerParams(vmem_limit_bytes=_VMEM_LIMIT),
    )(sel, h, w, b)


# ----------------------------------------------------------------------------
# Forward pass orchestration (glue)
# ----------------------------------------------------------------------------

def encoder_forward(params, x, adj, depth, sel_dag, sel_glob, cfg):
    D, H, hd = cfg["embed_dim"], cfg["num_heads"], cfg["head_dim"]

    # prep layer: Linear(num_node_features -> embed_dim)
    h0 = linear(x, params["w_in"], params["b_in"])

    # gnn.PositionalEncoding(embed_dim) over node depth (sinusoidal, base_freq=1e-4) — glue
    freq = jnp.power(1e-4, jnp.linspace(0.0, 1.0, D // 2)).astype(jnp.float32)
    ang = depth.astype(jnp.float32)[:, None] * freq[None, :]
    dagpe = jnp.concatenate([jnp.sin(ang), jnp.cos(ang)], axis=-1)   # [N, D]

    # each layer = ONE fused pallas_call (dagpe add + attention + gating + BN/MLP + gating)
    for lp in params["layers"]:
        h0 = fused_layer(h0, dagpe, adj, lp, H, hd)
    h_node = h0

    # DagEncoder: global_max_pool over stage nodes per dag + Linear (fused)
    h_dag = pool_linear(sel_dag, h_node, params["w_dag"], params["b_dag"])

    # global encoder: segment_max_csr over dags per observation + Linear (fused)
    h_glob = pool_linear(sel_glob, h_dag, params["w_glob"], params["b_glob"])

    return {"node": h_node, "dag": h_dag, "glob": h_glob}


# ----------------------------------------------------------------------------
# Deterministic parameter initialization (synthetic, shapes from module __init__,
# with projection matrices pre-concatenated for wide single matmuls in-kernel)
# ----------------------------------------------------------------------------

def init_params(key, F, D, H, L):
    keys = iter(jax.random.split(key, 256))

    def dense(fan_in, fan_out, bias_scale=0.01):
        w = jax.random.normal(next(keys), (fan_in, fan_out), jnp.float32) / math.sqrt(fan_in)
        b = jax.random.normal(next(keys), (1, fan_out), jnp.float32) * bias_scale
        return w, b

    def gate_params():
        wr, bwr = dense(D, D); ur, bur = dense(D, D)
        wz, bwz = dense(D, D); uz, buz = dense(D, D)
        wg, bwg = dense(D, D); ug, bug = dense(D, D)
        return {"wy": jnp.concatenate([wr, wz, wg], axis=1),    # y-side  [D, 3D] (Wr|Wz|Wg)
                "bwy": jnp.concatenate([bwr, bwz, bwg], axis=1),
                "ux": jnp.concatenate([ur, uz], axis=1),        # x-side  [D, 2D] (Ur|Uz)
                "bux": jnp.concatenate([bur, buz], axis=1),
                "ug": ug, "bug": bug}                           # Ug applied to r*x

    params = {}
    params["w_in"], params["b_in"] = dense(F, D)

    layers = []
    for _ in range(L):
        lp = {}
        wq, bq = dense(D, D); wk, bk = dense(D, D); wv, bv = dense(D, D)
        lp["attn"] = {
            "wqkv": jnp.concatenate([wq, wk, wv], axis=1),      # [D, 3D]
            "bqkv": jnp.concatenate([bq, bk, bv], axis=1),      # [1, 3D]
            "gamma": 1.0 + 0.1 * jax.random.normal(next(keys), (1, D), jnp.float32),
            "beta": 0.1 * jax.random.normal(next(keys), (1, D), jnp.float32),
        }
        # NOTE: the reference graph's Conv1d(k=3,pad=1)+ReLU branch is dead code
        # (its output is never consumed), so no parameters / compute for it.
        lp["gate1"] = gate_params()
        bnp = {"bn_g": 1.0 + 0.1 * jax.random.normal(next(keys), (1, D), jnp.float32),
               "bn_b": 0.1 * jax.random.normal(next(keys), (1, D), jnp.float32),
               "bn_m": jnp.zeros((1, D), jnp.float32),          # running_mean (eval mode)
               "bn_v": jnp.ones((1, D), jnp.float32)}           # running_var  (eval mode)
        bnp["w1"], bnp["b1"] = dense(D, 2 * D)
        bnp["w2"], bnp["b2"] = dense(2 * D, D)
        lp["bn_mlp"] = bnp
        lp["gate2"] = gate_params()
        layers.append(lp)
    params["layers"] = layers

    params["w_dag"], params["b_dag"] = dense(D, D)     # DagEncoder.lin
    params["w_glob"], params["b_glob"] = dense(D, D)   # global_encoder Linear
    return params


# ----------------------------------------------------------------------------
# Demo
# ----------------------------------------------------------------------------

if __name__ == "__main__":
    F, D, H, L = 5, 32, 4, 2           # num_node_features, embed_dim, num_heads, num_layers
    hd = D // H
    graph_sizes = [6, 5, 5]
    G = len(graph_sizes)
    N = sum(graph_sizes)

    key = jax.random.PRNGKey(0)
    k_x, k_p = jax.random.split(key)

    x = jax.random.normal(k_x, (N, F), jnp.float32)

    batch_ids, depth_list, mask, src, tgt = [], [], [], [], []
    offset = 0
    for g, sz in enumerate(graph_sizes):
        for i in range(sz):
            batch_ids.append(g)
            depth_list.append(i)
            mask.append(i >= sz // 2)                 # "stage" nodes; >=1 per graph
        for i in range(sz - 1):
            src.append(offset + i); tgt.append(offset + i + 1)   # chain edges
        src.append(offset); tgt.append(offset + sz - 1)           # root -> leaf shortcut
        offset += sz

    batch_ids = jnp.array(batch_ids, jnp.int32)
    depth = jnp.array(depth_list, jnp.int32)
    stage_mask = jnp.array(mask, bool)
    edge_index = jnp.array([src, tgt], jnp.int32)     # [2, E], row0 = source, row1 = target

    # glue: dense int8 adjacency mask adj[i, j] = 1 iff there is an edge j -> i
    # (int8 storage: 4x less HBM traffic per layer; float mask built in-kernel)
    adj = jnp.zeros((N, N), jnp.int8).at[edge_index[1], edge_index[0]].set(1)

    # glue: selection matrices for the fused segment-max + Linear kernels
    sel_dag = ((batch_ids[None, :] == jnp.arange(G)[:, None])
               & stage_mask[None, :]).astype(jnp.float32)          # [G, N]
    obs_ptr = jnp.array([0, G], jnp.int32)            # default obs_ptr from reference forward
    segs = jnp.arange(G)[None, :]
    sel_glob = ((segs >= obs_ptr[:-1, None])
                & (segs < obs_ptr[1:, None])).astype(jnp.float32)  # [num_obs, G]

    params = init_params(k_p, F, D, H, L)
    cfg = dict(embed_dim=D, num_heads=H, head_dim=hd, num_layers=L)

    out = encoder_forward(params, x, adj, depth, sel_dag, sel_glob, cfg)
    out = jax.tree_util.tree_map(jax.block_until_ready, out)

    assert out["node"].shape == (N, D)
    assert out["dag"].shape == (G, D)
    assert out["glob"].shape == (1, D)
    for v in out.values():
        assert bool(jnp.all(jnp.isfinite(v)))
    print("KERNEL_OK")
</pallas_src>

<mosaic_0001>
module attributes {stable_mosaic.version = 11 : i64} {
  func.func @_linear_kernel(%arg0: memref<16x5xf32, #tpu.memory_space<vmem>>, %arg1: memref<5x32xf32, #tpu.memory_space<vmem>>, %arg2: memref<1x32xf32, #tpu.memory_space<vmem>>, %arg3: memref<16x32xf32, #tpu.memory_space<vmem>>) attributes {dimension_semantics = [], scalar_prefetch = 0 : i64, scratch_operands = 0 : i64, tpu.core_type = #tpu.core_type<tc>} {
    %c0 = arith.constant 0 : index
    %c0_0 = arith.constant 0 : index
    %0 = vector.load %arg0[%c0, %c0_0] : memref<16x5xf32, #tpu.memory_space<vmem>>, vector<16x5xf32>
    %c0_1 = arith.constant 0 : index
    %c0_2 = arith.constant 0 : index
    %1 = vector.load %arg1[%c0_1, %c0_2] : memref<5x32xf32, #tpu.memory_space<vmem>>, vector<5x32xf32>
    %cst = arith.constant dense<0.000000e+00> : vector<16x32xf32>
    %2 = tpu.matmul %0, %1, %cst {dimension_numbers = #tpu.dot_dimension_numbers<[1], [0], [0], [1], [0, 0, 1, 1], [], []>} : vector<16x5xf32>, vector<5x32xf32>, vector<16x32xf32> -> vector<16x32xf32>
    %c0_3 = arith.constant 0 : index
    %c0_4 = arith.constant 0 : index
    %3 = vector.load %arg2[%c0_3, %c0_4] : memref<1x32xf32, #tpu.memory_space<vmem>>, vector<1x32xf32>
    %4 = vector.broadcast %3 : vector<1x32xf32> to vector<16x32xf32>
    %5 = arith.addf %2, %4 : vector<16x32xf32>
    %c0_5 = arith.constant 0 : index
    %c0_6 = arith.constant 0 : index
    %6 = vector.load %arg3[%c0_5, %c0_6] : memref<16x32xf32, #tpu.memory_space<vmem>>, vector<16x32xf32>
    tpu.vector_store %arg3[%c0_5, %c0_6], %5 {strides = array<i32>} : memref<16x32xf32, #tpu.memory_space<vmem>>, vector<16x32xf32>,
    return
  }
}

</mosaic_0001>

<llo_original>
// kernel: tpu_custom_call.1
$region0: #{tpu_custom_call.1}
  #allocation0 [shape = 'u32[]', space=smem, size = 0x4, offset = 0x4, fixed_abs, tag = 'smem constant byte address 0x4 - core index']
  #allocation1 [shape = 'u32[144,128]{1,0:T(1,128)}', space=vmem, size = 0x12000, scoped, tag = 'internal scratch']
  %s0 = inlined_call_operand.vmem [shape: f32[16,5], index: 0, kind: input, shape index: {}]
  %s1 = inlined_call_operand.vmem [shape: f32[5,32], index: 1, kind: input, shape index: {}]
  %s2 = inlined_call_operand.vmem [shape: f32[1,32], index: 2, kind: input, shape index: {}]
  %s3 = inlined_call_operand.hbm [shape: f32[16,32], index: 3, kind: output, shape index: {}]
  %s4 = sld [smem:[#allocation0]]
  $region22: #{tpu_custom_call.1} parent=0
    _
  %s6 = ssub.s32 1, %s4
  %s7 = scalar_select 0, %s6, %s4
  $region1: #{tpu_custom_call.1} parent=0
    #allocation2 [shape = 'u8[8192]{0}', space=vmem, size = 0x2000, scoped, tag = 'output window, operand 0, single buffered']
    #allocation3 [shape = 's32[1]{0}', space=sflag, size = 0x4, scoped, tag = 'scoped memory for tpu_custom_call.1']
    %8 = vsyncpa [#allocation3], 0
    // Predicated region
    $region2: #{tpu_custom_call.1} parent=1 // pred_check
      _
    $region3: #{tpu_custom_call.1} parent=1 // pred_check_branch
      %10 = sbr.rel (0) target = $region5
    $region4: #{tpu_custom_call.1} parent=1 // pred_region
      _
    $region5: #{tpu_custom_call.1} parent=1 // pred_fallthru
      _
    // Predicated region
    $region6: #{tpu_custom_call.1} parent=1 // pred_check
      _
    $region7: #{tpu_custom_call.1} parent=1 // pred_check_branch
      %12 = sbr.rel (0) target = $region9
    $region8: #{tpu_custom_call.1} parent=1 // pred_region
      _
    $region9: #{tpu_custom_call.1} parent=1 // pred_fallthru
      _
    // Predicated region
    $region10: #{tpu_custom_call.1} parent=1 // pred_check
      _
    $region11: #{tpu_custom_call.1} parent=1 // pred_check_branch
      %14 = sbr.rel (0) target = $region13
    $region12: #{tpu_custom_call.1} parent=1 // pred_region
      _
    $region13: #{tpu_custom_call.1} parent=1 // pred_fallthru
      _
    %v15 = vld [vmem:[%s0] sm:$0xff]
    %v16 = vld [vmem:[%s0 + $0x8] sm:$0xff]
    %v17 = vld [vmem:[%s1] sm:$0x1f]
    %v18 = vld [vmem:[%s2] sm:$0x1]
    %v20 = vlaneseq
    %v21 = vshrl.u32 %v20, 7
    %v22 = vsub.s32 0, %v21
    %v23 = vrot.slane %v18, %v22
    %vm25 = vcmask 39936
    %v27 = vsel %vm25, %v15, 0
    %v30 = vsel %vm25, %v16, 0
    %vm32 = vcmask 1044480
    %v34 = vsel %vm32, %v17, 0
    %36 = vmatprep.subr.mxu0 0.0
    %37 = vmatpush1.msra.mxu0 %v34
    %38 = vmatprep.subr.mxu0 0.0
    %39 = vmatpush1.msra.mxu0 0.0
    %40 = vmatprep.subr.mxu0 0.0
    %41 = vmatpush1.msra.mxu0 0.0
    %42 = vmatprep.subr.mxu0 0.0
    %43 = vmatpush1.msra.mxu0 0.0
    %44 = vmatprep.subr.mxu0 0.0
    %45 = vmatpush1.msra.mxu0 0.0
    %46 = vmatprep.subr.mxu0 0.0
    %47 = vmatpush1.msra.mxu0 0.0
    %48 = vmatprep.subr.mxu0 0.0
    %49 = vmatpush1.msra.mxu0 0.0
    %50 = vmatprep.subr.mxu0 0.0
    %51 = vmatpush1.msra.mxu0 0.0
    %52 = vmatprep.subr.mxu0 0.0
    %53 = vmatpush1.msra.mxu0 0.0
    %54 = vmatprep.subr.mxu0 0.0
    %55 = vmatpush1.msra.mxu0 0.0
    %56 = vmatprep.subr.mxu0 0.0
    %57 = vmatpush1.msra.mxu0 0.0
    %58 = vmatprep.subr.mxu0 0.0
    %59 = vmatpush1.msra.mxu0 0.0
    %60 = vmatprep.subr.mxu0 0.0
    %61 = vmatpush1.msra.mxu0 0.0
    %62 = vmatprep.subr.mxu0 0.0
    %63 = vmatpush1.msra.mxu0 0.0
    %64 = vmatprep.subr.mxu0 0.0
    %65 = vmatpush1.msra.mxu0 0.0
    %66 = vmatprep.subr.mxu0 0.0
    %67 = vmatpush1.msra.mxu0 0.0
    %68 = vmatprep.subr.mxu0 0.0
    %69 = vmatpush1.msra.mxu0 0.0
    %70 = vmatprep.subr.mxu0 0.0
    %71 = vmatpush1.msra.mxu0 0.0
    %72 = vmatprep.subr.mxu0 0.0
    %73 = vmatpush1.msra.mxu0 0.0
    %74 = vmatprep.subr.mxu0 0.0
    %75 = vmatpush1.msra.mxu0 0.0
    %76 = vmatprep.subr.mxu0 0.0
    %77 = vmatpush1.msra.mxu0 0.0
    %78 = vmatprep.subr.mxu0 0.0
    %79 = vmatpush1.msra.mxu0 0.0
    %80 = vmatprep.subr.mxu0 0.0
    %81 = vmatpush1.msra.mxu0 0.0
    %82 = vmatprep.subr.mxu0 0.0
    %83 = vmatpush1.msra.mxu0 0.0
    %84 = vmatprep.subr.mxu0 0.0
    %85 = vmatpush1.msra.mxu0 0.0
    %86 = vmatprep.subr.mxu0 0.0
    %87 = vmatpush1.msra.mxu0 0.0
    %88 = vmatprep.subr.mxu0 0.0
    %89 = vmatpush1.msra.mxu0 0.0
    %90 = vmatprep.subr.mxu0 0.0
    %91 = vmatpush1.msra.mxu0 0.0
    %92 = vmatprep.subr.mxu0 0.0
    %93 = vmatpush1.msra.mxu0 0.0
    %94 = vmatprep.subr.mxu0 0.0
    %95 = vmatpush1.msra.mxu0 0.0
    %96 = vmatprep.subr.mxu0 0.0
    %97 = vmatpush1.msra.mxu0 0.0
    %98 = vmatprep.subr.mxu0 0.0
    %99 = vmatpush1.msra.mxu0 0.0
    %100 = vmatprep.mubr.f32.mxu0 0.0
    %101 = vmatmul.mubr.f32.gmra.mrb[0].mxu0 %v27
    %v102 = vpop.f32.mrb[0].mxu0
    %v103 = vadd.f32 %v23, %v102
    %v104 = vpop.f32.mrb[0].mxu0
    %105 = vmatprep.mubr.f32.mxu0 0.0
    %106 = vmatmul.mubr.f32.gmra.mrb[0].mxu0 %v30
    %v107 = vpop.f32.mrb[0].mxu0
    %v108 = vadd.f32 %v23, %v107
    %v109 = vpop.f32.mrb[0].mxu0
    %110 = vdwg.mxu0
    %vm111 = vcmask 261120
    %112 = vst.msk [vmem:[#allocation2] sm:$0xff] %vm111, %v103
    %113 = vst.msk [vmem:[#allocation2 + $0x8] sm:$0xff] %vm111, %v108
    // Predicated region
    $region14: #{tpu_custom_call.1} parent=1 // pred_check
      _
    $region15: #{tpu_custom_call.1} parent=1 // pred_check_branch
      %115 = sbr.rel (0) target = $region17
    $region16: #{tpu_custom_call.1} parent=1 // pred_region
      %s117 = ssub.s32 256, 256
      %118 = vsyncadd [#allocation3], %s117
      %s119 = sshll.u32 [#allocation2], 4
      %s120 = int_to_ptr.vmem [resolvable:$true] %s119
      %125 = dma.vmem_to_hbm [thread:$0]  %s120, 256, %s3, [#allocation3], 128, 128, 8
    $region17: #{tpu_custom_call.1} parent=1 // pred_fallthru
      _
    // Predicated region
    $region18: #{tpu_custom_call.1} parent=1 // pred_check
      _
    $region19: #{tpu_custom_call.1} parent=1 // pred_check_branch
      %127 = sbr.rel (0) target = $region21
    $region20: #{tpu_custom_call.1} parent=1 // pred_region
      %128 = dma.done [#allocation3], 256
    $region21: #{tpu_custom_call.1} parent=1 // pred_fallthru
      _
    %129 = vsyncpa [#allocation3], 1

</llo_original>
